<compile_context>
chip_gen: v7x
topology: tpu7x:2x2x1
jax: 0.10.0
libtpu: 0.0.40
codegen_flags: <defaults>
</compile_context>

<pallas_src>
import jax
import jax.numpy as jnp
from jax import lax
from jax.experimental import pallas as pl
from jax.experimental.pallas import tpu as pltpu


_VMEM_LIMIT = 64 * 1024 * 1024
# x[tm,tk] . w[tn,tk] -> [tm,tn]  (contract last dims of both; no transpose needed)
_CONTRACT_LAST = (((1,), (1,)), ((), ()))


# ---------------------------------------------------------------------------
# helpers
# ---------------------------------------------------------------------------

def _round_up(v, m):
    return ((v + m - 1) // m) * m


def _pad2d(a, rows, cols):
    pr, pc = rows - a.shape[0], cols - a.shape[1]
    if pr == 0 and pc == 0:
        return a
    return jnp.pad(a, ((0, pr), (0, pc)))


def _tiles(batch, n_in, n_out, tm, tn, tk):
    # defaults sized so 2 double-buffered weight streams + x/eps/out/acc fit
    # comfortably inside v7x's 32 MiB scoped VMEM; v5e/v6e have headroom to spare.
    if tm is None:
        tm = min(128, _round_up(batch, 8))
    if tn is None:
        tn = min(256, _round_up(n_out, 128))
    if tk is None:
        tk = min(512, _round_up(n_in, 128))
    return tm, tn, tk


# ---------------------------------------------------------------------------
# kernels
# ---------------------------------------------------------------------------

def _s2_kernel(logsig2_ref, s2_ref):
    # training path: clamped log-variance (torch: clamp(-20, 11)), exp once.
    s2_ref[...] = jnp.exp(jnp.clip(logsig2_ref[...], -20.0, 11.0))


def _sample_weight_kernel(mu_ref, logsig2_ref, rnd_ref, w_ref):
    # eval path of the PyTorch module uses the UNclamped logsig2 (reproduced).
    w_ref[...] = mu_ref[...] + jnp.sqrt(jnp.exp(logsig2_ref[...])) * rnd_ref[...]


def _train_matmul_kernel(x_ref, mu_ref, s2_ref, bias_ref, eps_ref, out_ref,
                         acc_mu, acc_var):
    k = pl.program_id(2)

    @pl.when(k == 0)
    def _():
        acc_mu[...] = jnp.zeros_like(acc_mu)
        acc_var[...] = jnp.zeros_like(acc_var)

    x = x_ref[...]
    acc_mu[...] += lax.dot_general(x, mu_ref[...], _CONTRACT_LAST,
                                   preferred_element_type=jnp.float32)
    acc_var[...] += lax.dot_general(x * x, s2_ref[...], _CONTRACT_LAST,
                                    preferred_element_type=jnp.float32)

    @pl.when(k == pl.num_programs(2) - 1)
    def _():
        out_ref[...] = (acc_mu[...] + bias_ref[...]
                        + jnp.sqrt(acc_var[...]) * eps_ref[...]).astype(out_ref.dtype)


def _linear_matmul_kernel(x_ref, w_ref, bias_ref, out_ref, acc):
    k = pl.program_id(2)

    @pl.when(k == 0)
    def _():
        acc[...] = jnp.zeros_like(acc)

    acc[...] += lax.dot_general(x_ref[...], w_ref[...], _CONTRACT_LAST,
                                preferred_element_type=jnp.float32)

    @pl.when(k == pl.num_programs(2) - 1)
    def _():
        out_ref[...] = (acc[...] + bias_ref[...]).astype(out_ref.dtype)


# ---------------------------------------------------------------------------
# wrappers
# ---------------------------------------------------------------------------

def _elementwise_weight_call(kernel, inputs, n_pad, k_pad, tn, tk):
    """Tiled elementwise pass over a [n_pad, k_pad] weight-shaped tensor."""
    spec = pl.BlockSpec((tn, tk), lambda j, k: (j, k))
    return pl.pallas_call(
        kernel,
        out_shape=jax.ShapeDtypeStruct((n_pad, k_pad), jnp.float32),
        grid=(n_pad // tn, k_pad // tk),
        in_specs=[spec] * len(inputs),
        out_specs=spec,
        compiler_params=pltpu.CompilerParams(
            dimension_semantics=("parallel", "parallel"),
            vmem_limit_bytes=_VMEM_LIMIT),
    )(*inputs)


def vblinear_forward_train(x, mu_w, logsig2_w, bias, eps, *, tm=None, tn=None, tk=None):
    """Training-mode forward (local reparameterization trick)."""
    B, n_in = x.shape
    n_out = mu_w.shape[0]
    tm, tn, tk = _tiles(B, n_in, n_out, tm, tn, tk)
    Bp, Np, Kp = _round_up(B, tm), _round_up(n_out, tn), _round_up(n_in, tk)

    # native [n_out, n_in] weight layout -- no HBM transposes.
    mu_p = _pad2d(mu_w.astype(jnp.float32), Np, Kp)
    ls_p = _pad2d(logsig2_w.astype(jnp.float32), Np, Kp)
    x_p = _pad2d(x.astype(jnp.float32), Bp, Kp)
    eps_p = _pad2d(eps.astype(jnp.float32), Bp, Np)
    bias_p = _pad2d(bias.astype(jnp.float32).reshape(1, n_out), 1, Np)

    # Hoist exp(clip(logsig2)) out of the batch-tiled hot loop: one weight pass.
    s2_p = _elementwise_weight_call(_s2_kernel, (ls_p,), Np, Kp, tn, tk)

    x_spec = pl.BlockSpec((tm, tk), lambda i, j, k: (i, k))
    w_spec = pl.BlockSpec((tn, tk), lambda i, j, k: (j, k))
    b_spec = pl.BlockSpec((1, tn), lambda i, j, k: (0, j))
    o_spec = pl.BlockSpec((tm, tn), lambda i, j, k: (i, j))

    cost = pl.CostEstimate(
        flops=2 * 2 * Bp * Np * Kp,
        transcendentals=0,
        bytes_accessed=4 * (Bp * Kp + 2 * Np * Kp + 2 * Bp * Np + Np))

    out = pl.pallas_call(
        _train_matmul_kernel,
        out_shape=jax.ShapeDtypeStruct((Bp, Np), jnp.float32),
        grid=(Bp // tm, Np // tn, Kp // tk),
        in_specs=[x_spec, w_spec, w_spec, b_spec, o_spec],
        out_specs=o_spec,
        scratch_shapes=[pltpu.VMEM((tm, tn), jnp.float32),
                        pltpu.VMEM((tm, tn), jnp.float32)],
        compiler_params=pltpu.CompilerParams(
            dimension_semantics=("parallel", "parallel", "arbitrary"),
            vmem_limit_bytes=_VMEM_LIMIT),
        cost_estimate=cost,
    )(x_p, mu_p, s2_p, bias_p, eps_p)
    return out[:B, :n_out]


def vblinear_forward_eval(x, mu_w, logsig2_w, bias, random, *, tm=None, tn=None, tk=None):
    """Eval-mode forward: out = x @ (mu_w + sqrt(exp(logsig2_w)) * random)^T + b."""
    B, n_in = x.shape
    n_out = mu_w.shape[0]
    tm, tn, tk = _tiles(B, n_in, n_out, tm, tn, tk)
    Bp, Np, Kp = _round_up(B, tm), _round_up(n_out, tn), _round_up(n_in, tk)

    mu_p = _pad2d(mu_w.astype(jnp.float32), Np, Kp)
    ls_p = _pad2d(logsig2_w.astype(jnp.float32), Np, Kp)
    rnd_p = _pad2d(random.astype(jnp.float32), Np, Kp)
    x_p = _pad2d(x.astype(jnp.float32), Bp, Kp)
    bias_p = _pad2d(bias.astype(jnp.float32).reshape(1, n_out), 1, Np)

    # Sample the weight ONCE (elementwise); the batched matmul then streams a
    # single weight-sized tensor instead of three.
    # TODO(synk): the noise could be generated on-chip (pltpu.prng_seed/prng_random_bits)
    # to save one weight-sized HBM read, but the explicit `random` input mirrors the
    # PyTorch module's cached self.random and keeps the run deterministic/checkable.
    w_p = _elementwise_weight_call(_sample_weight_kernel, (mu_p, ls_p, rnd_p),
                                   Np, Kp, tn, tk)

    x_spec = pl.BlockSpec((tm, tk), lambda i, j, k: (i, k))
    w_spec = pl.BlockSpec((tn, tk), lambda i, j, k: (j, k))
    b_spec = pl.BlockSpec((1, tn), lambda i, j, k: (0, j))
    o_spec = pl.BlockSpec((tm, tn), lambda i, j, k: (i, j))

    cost = pl.CostEstimate(
        flops=2 * Bp * Np * Kp,
        transcendentals=0,
        bytes_accessed=4 * (Bp * Kp + Np * Kp + Bp * Np + Np))

    out = pl.pallas_call(
        _linear_matmul_kernel,
        out_shape=jax.ShapeDtypeStruct((Bp, Np), jnp.float32),
        grid=(Bp // tm, Np // tn, Kp // tk),
        in_specs=[x_spec, w_spec, b_spec],
        out_specs=o_spec,
        scratch_shapes=[pltpu.VMEM((tm, tn), jnp.float32)],
        compiler_params=pltpu.CompilerParams(
            dimension_semantics=("parallel", "parallel", "arbitrary"),
            vmem_limit_bytes=_VMEM_LIMIT),
        cost_estimate=cost,
    )(x_p, w_p, bias_p)
    return out[:B, :n_out]


# ---------------------------------------------------------------------------
# parameter init (deterministic, mirrors reset_parameters)
# ---------------------------------------------------------------------------

def init_vblinear_params(key, n_in, n_out, net_activation_inner="relu"):
    k_mu, k_ls = jax.random.split(key)
    if net_activation_inner == "tanh":
        std = (2.0 / (n_in + n_out)) ** 0.5          # xavier_normal
    else:                                            # relu/elu -> kaiming fan_in, relu gain
        std = (2.0 / n_in) ** 0.5
    mu_w = std * jax.random.normal(k_mu, (n_out, n_in), dtype=jnp.float32)
    logsig2_w = -9.0 + 0.001 * jax.random.normal(k_ls, (n_out, n_in), dtype=jnp.float32)
    bias = jnp.zeros((n_out,), dtype=jnp.float32)
    return mu_w, logsig2_w, bias


# ---------------------------------------------------------------------------
# main
# ---------------------------------------------------------------------------

if __name__ == "__main__":
    # Small layer, but chosen so the default tiles give a (2, 2, 2) grid with
    # padding on every axis (exercises accumulator init/finalize + padding paths).
    B, N_IN, N_OUT = 192, 768, 320

    key = jax.random.PRNGKey(0)
    k_param, k_x, k_eps, k_rnd = jax.random.split(key, 4)

    mu_w, logsig2_w, bias = init_vblinear_params(k_param, N_IN, N_OUT, "relu")
    x = jax.random.normal(k_x, (B, N_IN), dtype=jnp.float32)
    eps = jax.random.normal(k_eps, (B, N_OUT), dtype=jnp.float32)      # randn_like(mu_out)
    rnd = jax.random.normal(k_rnd, (N_OUT, N_IN), dtype=jnp.float32)   # randn_like(logsig2_w)

    out_train = jax.block_until_ready(vblinear_forward_train(x, mu_w, logsig2_w, bias, eps))
    out_eval = jax.block_until_ready(vblinear_forward_eval(x, mu_w, logsig2_w, bias, rnd))

    # pure-JAX references (full-precision matmuls)
    with jax.default_matmul_precision("highest"):
        s2 = jnp.exp(jnp.clip(logsig2_w, -20.0, 11.0))
        ref_train = (x @ mu_w.T + bias) + jnp.sqrt((x * x) @ s2.T) * eps
        w_sampled = mu_w + jnp.sqrt(jnp.exp(logsig2_w)) * rnd
        ref_eval = x @ w_sampled.T + bias

    # Tolerance covers MXU f32 pass-precision / accumulation-order differences
    # vs the XLA reference; real tiling bugs produce O(0.1-1) errors.
    assert jnp.allclose(out_train, ref_train, atol=1e-2, rtol=1e-2), \
        float(jnp.max(jnp.abs(out_train - ref_train)))
    assert jnp.allclose(out_eval, ref_eval, atol=1e-2, rtol=1e-2), \
        float(jnp.max(jnp.abs(out_eval - ref_eval)))

    print("KERNEL_OK")
</pallas_src>

<mosaic_0001>
module attributes {stable_mosaic.version = 11 : i64} {
  func.func @_s2_kernel(%arg0: i32, %arg1: i32, %arg2: memref<256x512xf32, #tpu.memory_space<vmem>>, %arg3: memref<256x512xf32, #tpu.memory_space<vmem>>) attributes {dimension_semantics = [#tpu.dimension_semantics<parallel>, #tpu.dimension_semantics<parallel>], iteration_bounds = array<i64: 2, 2>, scalar_prefetch = 0 : i64, scratch_operands = 0 : i64, tpu.core_type = #tpu.core_type<tc>, window_params = [{transform_indices = @transform_0, window_bounds = array<i64: 256, 512>}, {transform_indices = @transform_1, window_bounds = array<i64: 256, 512>}]} {
    %c0 = arith.constant 0 : index
    %c0_0 = arith.constant 0 : index
    %0 = vector.load %arg2[%c0, %c0_0] : memref<256x512xf32, #tpu.memory_space<vmem>>, vector<256x512xf32>
    %cst = arith.constant -2.000000e+01 : f32
    %cst_1 = arith.constant 1.100000e+01 : f32
    %1 = vector.broadcast %cst : f32 to vector<256x512xf32>
    %2 = arith.maximumf %1, %0 : vector<256x512xf32>
    %3 = vector.broadcast %cst_1 : f32 to vector<256x512xf32>
    %4 = arith.minimumf %3, %2 : vector<256x512xf32>
    %5 = math.exp %4 : vector<256x512xf32>
    %c0_2 = arith.constant 0 : index
    %c0_3 = arith.constant 0 : index
    %6 = vector.load %arg3[%c0_2, %c0_3] : memref<256x512xf32, #tpu.memory_space<vmem>>, vector<256x512xf32>
    tpu.vector_store %arg3[%c0_2, %c0_3], %5 {strides = array<i32>} : memref<256x512xf32, #tpu.memory_space<vmem>>, vector<256x512xf32>,
    return
  }
  func.func @transform_0(%arg0: i32, %arg1: i32) -> (i32, i32) {
    %c0_i32 = arith.constant 0 : i32
    return %arg0, %arg1 : i32, i32
  }
  func.func @transform_1(%arg0: i32, %arg1: i32) -> (i32, i32) {
    %c0_i32 = arith.constant 0 : i32
    return %arg0, %arg1 : i32, i32
  }
}

</mosaic_0001>

<llo_original>
// kernel: tpu_custom_call.1
$region0: #{tpu_custom_call.1}
  #allocation0 [shape = 'u32[]', space=smem, size = 0x4, offset = 0x4, fixed_abs, tag = 'smem constant byte address 0x4 - core index']
  #allocation1 [shape = 'u32[144,128]{1,0:T(1,128)}', space=vmem, size = 0x12000, scoped, tag = 'internal scratch']
  %s0 = inlined_call_operand.hbm [shape: f32[512,1024], index: 0, kind: input, shape index: {}]
  %s1 = inlined_call_operand.hbm [shape: f32[512,1024], index: 1, kind: output, shape index: {}]
  %s2 = sld [smem:[#allocation0]]
  $region41: #{tpu_custom_call.1} parent=0
    _
  %s4 = ssub.s32 1, %s2
  %s5 = scalar_select 0, %s4, %s2
  $region1: #{tpu_custom_call.1} parent=0
    #allocation2 [shape = 'u8[1048576]{0}', space=vmem, size = 0x100000, scoped, tag = 'input window, operand 0']
    #allocation3 [shape = 's32[2]{0}', space=sflag, size = 0x8, scoped, tag = 'scoped memory for tpu_custom_call.1']
    #allocation4 [shape = 's32[2]{0}', space=sflag, size = 0x8, scoped, tag = 'scoped memory for tpu_custom_call.1']
    #allocation5 [shape = 'u8[1048576]{0}', space=vmem, size = 0x100000, scoped, tag = 'output window, operand 0']
    %6 = vsyncpa [#allocation3], 0
    %s7 = scalar_lea.sflag [#allocation3], 1
    %8 = vsyncpa %s7, 0
    %9 = vsyncpa [#allocation4], 0
    %s10 = scalar_lea.sflag [#allocation4], 1
    %11 = vsyncpa %s10, 0
    loop: start=0, step=1, limit=6
    $region2: #{tpu_custom_call.1} parent=1 // loop_pre_header
      _
    $region3: #{tpu_custom_call.1} parent=1 // loop_header
      %s13 = sphi 0, %s17
      %p14 = scmp.ge.s32.totalorder %s13, 6
      %s20 = sphi 0, %s32
      %s21 = sphi 0, %s28
      %s22 = sphi 0, %s20
      %s23 = sphi 0, %s21
      %s24 = sphi 0, %s22
      %s25 = sphi 0, %s23
      %s37 = sphi 0, %s39
      %s40 = sphi 0, %s37
      %s41 = sphi 0, %s40
      %s57 = sphi 0, %s41
      %s65 = sphi 0, %s67
      %s68 = sphi 0, %s65
      %s69 = sphi 0, %s68
      %s85 = sphi 0, %s69
    $region4: #{tpu_custom_call.1} parent=1 // loop_header_branch
      %16 = sbr.rel (%p14) target = $region8
    $region5: #{tpu_custom_call.1} parent=1 // loop_body
      %s18 = ssub.s32 %s13, 1
      %s19 = ssub.s32 %s13, 2
      %s26 = sadd.s32 1, %s21
      %p27 = scmp.ge.s32.totalorder %s26, 2
      %s28 = scalar_select %p27, 0, %s26
      %s29 = sadd.s32 1, %s20
      %s30 = scalar_select %p27, %s29, %s20
      %p31 = scmp.ge.s32.totalorder %s30, 2
      %s32 = scalar_select %p31, 0, %s30
      %s33 = ssub.s32 %s20, %s32
      %s34 = ssub.s32 %s21, %s28
      %s35 = sor.u32 %s33, %s34
      %p36 = scmp.eq.s32.totalorder %s35, 0
      %s38 = sadd.s32 %s37, 1
      %s39 = scalar_select %p36, %s37, %s38
      %p42 = pneg %p36
      %p43 = scmp.eq.s32.totalorder %s13, 3
      %p44 = por %p42, %p43
      %p45 = scmp.ne.s32.totalorder %s37, %s40
      %p46 = scmp.eq.s32.totalorder %s13, 0
      %p47 = por %p45, %p46
      %p48 = scmp.ne.s32.totalorder %s37, %s40
      %p49 = scmp.eq.s32.totalorder %s18, 3
      %p50 = por %p48, %p49
      %p51 = scmp.ne.s32.totalorder %s40, %s41
      %p52 = scmp.eq.s32.totalorder %s18, 0
      %p53 = por %p51, %p52
      %p54 = scmp.ne.s32.totalorder %s40, %s41
      %p55 = scmp.eq.s32.totalorder %s19, 3
      %p56 = por %p54, %p55
      %p58 = scmp.ne.s32.totalorder %s41, %s57
      %p59 = scmp.eq.s32.totalorder %s19, 0
      %p60 = por %p58, %p59
      %s61 = ssub.s32 %s20, %s32
      %s62 = ssub.s32 %s21, %s28
      %s63 = sor.u32 %s61, %s62
      %p64 = scmp.eq.s32.totalorder %s63, 0
      %s66 = sadd.s32 %s65, 1
      %s67 = scalar_select %p64, %s65, %s66
      %p70 = pneg %p64
      %p71 = scmp.eq.s32.totalorder %s13, 3
      %p72 = por %p70, %p71
      %p73 = scmp.ne.s32.totalorder %s65, %s68
      %p74 = scmp.eq.s32.totalorder %s13, 0
      %p75 = por %p73, %p74
      %p76 = scmp.ne.s32.totalorder %s65, %s68
      %p77 = scmp.eq.s32.totalorder %s18, 3
      %p78 = por %p76, %p77
      %p79 = scmp.ne.s32.totalorder %s68, %s69
      %p80 = scmp.eq.s32.totalorder %s18, 0
      %p81 = por %p79, %p80
      %p82 = scmp.ne.s32.totalorder %s68, %s69
      %p83 = scmp.eq.s32.totalorder %s19, 3
      %p84 = por %p82, %p83
      %p86 = scmp.ne.s32.totalorder %s69, %s85
      %p87 = scmp.eq.s32.totalorder %s19, 0
      %p88 = por %p86, %p87
      %p89 = scmp.le.s32.totalorder 1, %s13
      %p90 = scmp.lt.s32.totalorder %s13, 5
      %p91 = pnand %p89, %p90
      %p92 = pneg %p91
      // Predicated region
      $region9: #{tpu_custom_call.1} parent=5 // pred_check
        _
      $region10: #{tpu_custom_call.1} parent=5 // pred_check_branch
        %94 = sbr.rel (%p91) target = $region12
      $region11: #{tpu_custom_call.1} parent=5 // pred_region
        %s95 = ssub.s32 %s13, 1
      $region12: #{tpu_custom_call.1} parent=5 // pred_fallthru
        _
      %p96 = scmp.lt.s32.totalorder %s13, 4
      // Predicated region
      $region13: #{tpu_custom_call.1} parent=5 // pred_check
        %p97 = pneg %p96
      $region14: #{tpu_custom_call.1} parent=5 // pred_check_branch
        %99 = sbr.rel (%p97) target = $region16
      $region15: #{tpu_custom_call.1} parent=5 // pred_region
        // Predicated region
        $region17: #{tpu_custom_call.1} parent=15 // pred_check
          %p100 = pneg %p47
        $region18: #{tpu_custom_call.1} parent=15 // pred_check_branch
          %102 = sbr.rel (%p100) target = $region20
        $region19: #{tpu_custom_call.1} parent=15 // pred_region
          %s103 = sand.u32 %s37, 1
          %s104 = scalar_lea.sflag [#allocation3], %s103
          %s105 = sand.u32 %s37, 1
          %s106 = smul.addr %s105, 1024
          %s107 = scalar_lea.vmem [#allocation2], %s106
          %s108 = smul.u32 32, %s20
          %s109 = smul.u32 4, %s21
          %s111 = ssub.s32 16384, 16384
          %112 = vsyncadd %s104, %s111
          %s113 = smul.addr %s108, 8
          %s114 = sadd.s32 %s109, %s113
          %s115 = smul.addr %s114, 128
          %s116 = scalar_lea.hbm %s0, %s115
          %s117 = sshll.u32 %s107, 4
          %s118 = int_to_ptr.vmem [resolvable:$true] %s117
          %123 = dma.hbm_to_vmem [thread:$0]  %s116, 16384, %s118, %s104, 1024, 512, 32
        $region20: #{tpu_custom_call.1} parent=15 // pred_fallthru
          _
      $region16: #{tpu_custom_call.1} parent=5 // pred_fallthru
        _
      %p124 = scmp.le.s32.totalorder 1, %s13
      %p125 = scmp.lt.s32.totalorder %s13, 5
      %p126 = pnand %p124, %p125
      %p127 = pneg %p126
      // Predicated region
      $region21: #{tpu_custom_call.1} parent=5 // pred_check
        _
      $region22: #{tpu_custom_call.1} parent=5 // pred_check_branch
        %129 = sbr.rel (%p126) target = $region24
      $region23: #{tpu_custom_call.1} parent=5 // pred_region
        %s130 = ssub.s32 %s13, 1
        %s131 = sand.u32 %s40, 1
        %s132 = scalar_lea.sflag [#allocation3], %s131
        %s133 = sand.u32 %s40, 1
        %s134 = smul.addr %s133, 1024
        %s135 = scalar_lea.vmem [#allocation2], %s134
        // Predicated region
        $region25: #{tpu_custom_call.1} parent=23 // pred_check
          %p136 = pneg %p53
        $region26: #{tpu_custom_call.1} parent=23 // pred_check_branch
          %138 = sbr.rel (%p136) target = $region28
        $region27: #{tpu_custom_call.1} parent=23 // pred_region
          %139 = dma.done %s132, 16384
        $region28: #{tpu_custom_call.1} parent=23 // pred_fallthru
          _
        %s140 = sand.u32 %s40, 1
        %s141 = scalar_lea.sflag [#allocation3], %s140
        %s142 = sand.u32 %s40, 1
        %s143 = smul.addr %s142, 1024
        %s144 = scalar_lea.vmem [#allocation2], %s143
        %p145 = pneg %p53
        %p146 = pneg %p50
        %p147 = pneg %p81
        %p148 = pneg %p78
        %s149 = sand.u32 %s68, 1
        %s150 = scalar_lea.sflag [#allocation4], %s149
        %s151 = sand.u32 %s68, 1
        %s152 = smul.addr %s151, 1024
        %s153 = scalar_lea.vmem [#allocation5], %s152
        %s154 = smul.u32 32, %s22
        %s155 = smul.u32 4, %s23
        %s156 = smul.u32 32, %s22
        %s157 = smul.u32 4, %s23
        %v158 = vld [vmem:[%s135] sm:$0xff]
        %v159 = vld [vmem:[%s135 + $0x8] sm:$0xff]
        %v160 = vld [vmem:[%s135 + $0x10] sm:$0xff]
        %v161 = vld [vmem:[%s135 + $0x18] sm:$0xff]
        %v162 = vld [vmem:[%s135 + $0x20] sm:$0xff]
        %v163 = vld [vmem:[%s135 + $0x28] sm:$0xff]
        %v164 = vld [vmem:[%s135 + $0x30] sm:$0xff]
        %v165 = vld [vmem:[%s135 + $0x38] sm:$0xff]
        %v166 = vld [vmem:[%s135 + $0x40] sm:$0xff]
        %v167 = vld [vmem:[%s135 + $0x48] sm:$0xff]
        %v168 = vld [vmem:[%s135 + $0x50] sm:$0xff]
        %v169 = vld [vmem:[%s135 + $0x58] sm:$0xff]
        %v170 = vld [vmem:[%s135 + $0x60] sm:$0xff]
        %v171 = vld [vmem:[%s135 + $0x68] sm:$0xff]
        %v172 = vld [vmem:[%s135 + $0x70] sm:$0xff]
        %v173 = vld [vmem:[%s135 + $0x78] sm:$0xff]
        %v174 = vld [vmem:[%s135 + $0x80] sm:$0xff]
        %v175 = vld [vmem:[%s135 + $0x88] sm:$0xff]
        %v176 = vld [vmem:[%s135 + $0x90] sm:$0xff]
        %v177 = vld [vmem:[%s135 + $0x98] sm:$0xff]
        %v178 = vld [vmem:[%s135 + $0xa0] sm:$0xff]
        %v179 = vld [vmem:[%s135 + $0xa8] sm:$0xff]
        %v180 = vld [vmem:[%s135 + $0xb0] sm:$0xff]
        %v181 = vld [vmem:[%s135 + $0xb8] sm:$0xff]
        %v182 = vld [vmem:[%s135 + $0xc0] sm:$0xff]
        %v183 = vld [vmem:[%s135 + $0xc8] sm:$0xff]
        %v184 = vld [vmem:[%s135 + $0xd0] sm:$0xff]
        %v185 = vld [vmem:[%s135 + $0xd8] sm:$0xff]
        %v186 = vld [vmem:[%s135 + $0xe0] sm:$0xff]
        %v187 = vld [vmem:[%s135 + $0xe8] sm:$0xff]
        %v188 = vld [vmem:[%s135 + $0xf0] sm:$0xff]
        %v189 = vld [vmem:[%s135 + $0xf8] sm:$0xff]
        %v190 = vld [vmem:[%s135 + $0x100] sm:$0xff]
        %v191 = vld [vmem:[%s135 + $0x108] sm:$0xff]
        %v192 = vld [vmem:[%s135 + $0x110] sm:$0xff]
        %v193 = vld [vmem:[%s135 + $0x118] sm:$0xff]
        %v194 = vld [vmem:[%s135 + $0x120] sm:$0xff]
        %v195 = vld [vmem:[%s135 + $0x128] sm:$0xff]
        %v196 = vld [vmem:[%s135 + $0x130] sm:$0xff]
        %v197 = vld [vmem:[%s135 + $0x138] sm:$0xff]
        %v198 = vld [vmem:[%s135 + $0x140] sm:$0xff]
        %v199 = vld [vmem:[%s135 + $0x148] sm:$0xff]
        %v200 = vld [vmem:[%s135 + $0x150] sm:$0xff]
        %v201 = vld [vmem:[%s135 + $0x158] sm:$0xff]
        %v202 = vld [vmem:[%s135 + $0x160] sm:$0xff]
        %v203 = vld [vmem:[%s135 + $0x168] sm:$0xff]
        %v204 = vld [vmem:[%s135 + $0x170] sm:$0xff]
        %v205 = vld [vmem:[%s135 + $0x178] sm:$0xff]
        %v206 = vld [vmem:[%s135 + $0x180] sm:$0xff]
        %v207 = vld [vmem:[%s135 + $0x188] sm:$0xff]
        %v208 = vld [vmem:[%s135 + $0x190] sm:$0xff]
        %v209 = vld [vmem:[%s135 + $0x198] sm:$0xff]
        %v210 = vld [vmem:[%s135 + $0x1a0] sm:$0xff]
        %v211 = vld [vmem:[%s135 + $0x1a8] sm:$0xff]
        %v212 = vld [vmem:[%s135 + $0x1b0] sm:$0xff]
        %v213 = vld [vmem:[%s135 + $0x1b8] sm:$0xff]
        %v214 = vld [vmem:[%s135 + $0x1c0] sm:$0xff]
        %v215 = vld [vmem:[%s135 + $0x1c8] sm:$0xff]
        %v216 = vld [vmem:[%s135 + $0x1d0] sm:$0xff]
        %v217 = vld [vmem:[%s135 + $0x1d8] sm:$0xff]
        %v218 = vld [vmem:[%s135 + $0x1e0] sm:$0xff]
        %v219 = vld [vmem:[%s135 + $0x1e8] sm:$0xff]
        %v220 = vld [vmem:[%s135 + $0x1f0] sm:$0xff]
        %v221 = vld [vmem:[%s135 + $0x1f8] sm:$0xff]
        %v222 = vld [vmem:[%s135 + $0x200] sm:$0xff]
        %v223 = vld [vmem:[%s135 + $0x208] sm:$0xff]
        %v224 = vld [vmem:[%s135 + $0x210] sm:$0xff]
        %v225 = vld [vmem:[%s135 + $0x218] sm:$0xff]
        %v226 = vld [vmem:[%s135 + $0x220] sm:$0xff]
        %v227 = vld [vmem:[%s135 + $0x228] sm:$0xff]
        %v228 = vld [vmem:[%s135 + $0x230] sm:$0xff]
        %v229 = vld [vmem:[%s135 + $0x238] sm:$0xff]
        %v230 = vld [vmem:[%s135 + $0x240] sm:$0xff]
        %v231 = vld [vmem:[%s135 + $0x248] sm:$0xff]
        %v232 = vld [vmem:[%s135 + $0x250] sm:$0xff]
        %v233 = vld [vmem:[%s135 + $0x258] sm:$0xff]
        %v234 = vld [vmem:[%s135 + $0x260] sm:$0xff]
        %v235 = vld [vmem:[%s135 + $0x268] sm:$0xff]
        %v236 = vld [vmem:[%s135 + $0x270] sm:$0xff]
        %v237 = vld [vmem:[%s135 + $0x278] sm:$0xff]
        %v238 = vld [vmem:[%s135 + $0x280] sm:$0xff]
        %v239 = vld [vmem:[%s135 + $0x288] sm:$0xff]
        %v240 = vld [vmem:[%s135 + $0x290] sm:$0xff]
        %v241 = vld [vmem:[%s135 + $0x298] sm:$0xff]
        %v242 = vld [vmem:[%s135 + $0x2a0] sm:$0xff]
        %v243 = vld [vmem:[%s135 + $0x2a8] sm:$0xff]
        %v244 = vld [vmem:[%s135 + $0x2b0] sm:$0xff]
        %v245 = vld [vmem:[%s135 + $0x2b8] sm:$0xff]
        %v246 = vld [vmem:[%s135 + $0x2c0] sm:$0xff]
        %v247 = vld [vmem:[%s135 + $0x2c8] sm:$0xff]
        %v248 = vld [vmem:[%s135 + $0x2d0] sm:$0xff]
        %v249 = vld [vmem:[%s135 + $0x2d8] sm:$0xff]
        %v250 = vld [vmem:[%s135 + $0x2e0] sm:$0xff]
        %v251 = vld [vmem:[%s135 + $0x2e8] sm:$0xff]
        %v252 = vld [vmem:[%s135 + $0x2f0] sm:$0xff]
        %v253 = vld [vmem:[%s135 + $0x2f8] sm:$0xff]
        %v254 = vld [vmem:[%s135 + $0x300] sm:$0xff]
        %v255 = vld [vmem:[%s135 + $0x308] sm:$0xff]
        %v256 = vld [vmem:[%s135 + $0x310] sm:$0xff]
        %v257 = vld [vmem:[%s135 + $0x318] sm:$0xff]
        %v258 = vld [vmem:[%s135 + $0x320] sm:$0xff]
        %v259 = vld [vmem:[%s135 + $0x328] sm:$0xff]
        %v260 = vld [vmem:[%s135 + $0x330] sm:$0xff]
        %v261 = vld [vmem:[%s135 + $0x338] sm:$0xff]
        %v262 = vld [vmem:[%s135 + $0x340] sm:$0xff]
        %v263 = vld [vmem:[%s135 + $0x348] sm:$0xff]
        %v264 = vld [vmem:[%s135 + $0x350] sm:$0xff]
        %v265 = vld [vmem:[%s135 + $0x358] sm:$0xff]
        %v266 = vld [vmem:[%s135 + $0x360] sm:$0xff]
        %v267 = vld [vmem:[%s135 + $0x368] sm:$0xff]
        %v268 = vld [vmem:[%s135 + $0x370] sm:$0xff]
        %v269 = vld [vmem:[%s135 + $0x378] sm:$0xff]
        %v270 = vld [vmem:[%s135 + $0x380] sm:$0xff]
        %v271 = vld [vmem:[%s135 + $0x388] sm:$0xff]
        %v272 = vld [vmem:[%s135 + $0x390] sm:$0xff]
        %v273 = vld [vmem:[%s135 + $0x398] sm:$0xff]
        %v274 = vld [vmem:[%s135 + $0x3a0] sm:$0xff]
        %v275 = vld [vmem:[%s135 + $0x3a8] sm:$0xff]
        %v276 = vld [vmem:[%s135 + $0x3b0] sm:$0xff]
        %v277 = vld [vmem:[%s135 + $0x3b8] sm:$0xff]
        %v278 = vld [vmem:[%s135 + $0x3c0] sm:$0xff]
        %v279 = vld [vmem:[%s135 + $0x3c8] sm:$0xff]
        %v280 = vld [vmem:[%s135 + $0x3d0] sm:$0xff]
        %v281 = vld [vmem:[%s135 + $0x3d8] sm:$0xff]
        %v282 = vld [vmem:[%s135 + $0x3e0] sm:$0xff]
        %v283 = vld [vmem:[%s135 + $0x3e8] sm:$0xff]
        %v284 = vld [vmem:[%s135 + $0x3f0] sm:$0xff]
        %v285 = vld [vmem:[%s135 + $0x3f8] sm:$0xff]
        %v286 = vmax.f32 %v158, -20.0
        %v287 = vmax.f32 %v159, -20.0
        %v288 = vmax.f32 %v160, -20.0
        %v289 = vmax.f32 %v161, -20.0
        %v290 = vmax.f32 %v162, -20.0
        %v291 = vmax.f32 %v163, -20.0
        %v292 = vmax.f32 %v164, -20.0
        %v293 = vmax.f32 %v165, -20.0
        %v294 = vmax.f32 %v166, -20.0
        %v295 = vmax.f32 %v167, -20.0
        %v296 = vmax.f32 %v168, -20.0
        %v297 = vmax.f32 %v169, -20.0
        %v298 = vmax.f32 %v170, -20.0
        %v299 = vmax.f32 %v171, -20.0
        %v300 = vmax.f32 %v172, -20.0
        %v301 = vmax.f32 %v173, -20.0
        %v302 = vmax.f32 %v174, -20.0
        %v303 = vmax.f32 %v175, -20.0
        %v304 = vmax.f32 %v176, -20.0
        %v305 = vmax.f32 %v177, -20.0
        %v306 = vmax.f32 %v178, -20.0
        %v307 = vmax.f32 %v179, -20.0
        %v308 = vmax.f32 %v180, -20.0
        %v309 = vmax.f32 %v181, -20.0
        %v310 = vmax.f32 %v182, -20.0
        %v311 = vmax.f32 %v183, -20.0
        %v312 = vmax.f32 %v184, -20.0
        %v313 = vmax.f32 %v185, -20.0
        %v314 = vmax.f32 %v186, -20.0
        %v315 = vmax.f32 %v187, -20.0
        %v316 = vmax.f32 %v188, -20.0
        %v317 = vmax.f32 %v189, -20.0
        %v318 = vmax.f32 %v190, -20.0
        %v319 = vmax.f32 %v191, -20.0
        %v320 = vmax.f32 %v192, -20.0
        %v321 = vmax.f32 %v193, -20.0
        %v322 = vmax.f32 %v194, -20.0
        %v323 = vmax.f32 %v195, -20.0
        %v324 = vmax.f32 %v196, -20.0
        %v325 = vmax.f32 %v197, -20.0
        %v326 = vmax.f32 %v198, -20.0
        %v327 = vmax.f32 %v199, -20.0
        %v328 = vmax.f32 %v200, -20.0
        %v329 = vmax.f32 %v201, -20.0
        %v330 = vmax.f32 %v202, -20.0
        %v331 = vmax.f32 %v203, -20.0
        %v332 = vmax.f32 %v204, -20.0
        %v333 = vmax.f32 %v205, -20.0
        %v334 = vmax.f32 %v206, -20.0
        %v335 = vmax.f32 %v207, -20.0
        %v336 = vmax.f32 %v208, -20.0
        %v337 = vmax.f32 %v209, -20.0
        %v338 = vmax.f32 %v210, -20.0
        %v339 = vmax.f32 %v211, -20.0
        %v340 = vmax.f32 %v212, -20.0
        %v341 = vmax.f32 %v213, -20.0
        %v342 = vmax.f32 %v214, -20.0
        %v343 = vmax.f32 %v215, -20.0
        %v344 = vmax.f32 %v216, -20.0
        %v345 = vmax.f32 %v217, -20.0
        %v346 = vmax.f32 %v218, -20.0
        %v347 = vmax.f32 %v219, -20.0
        %v348 = vmax.f32 %v220, -20.0
        %v349 = vmax.f32 %v221, -20.0
        %v350 = vmax.f32 %v222, -20.0
        %v351 = vmax.f32 %v223, -20.0
        %v352 = vmax.f32 %v224, -20.0
        %v353 = vmax.f32 %v225, -20.0
        %v354 = vmax.f32 %v226, -20.0
        %v355 = vmax.f32 %v227, -20.0
        %v356 = vmax.f32 %v228, -20.0
        %v357 = vmax.f32 %v229, -20.0
        %v358 = vmax.f32 %v230, -20.0
        %v359 = vmax.f32 %v231, -20.0
        %v360 = vmax.f32 %v232, -20.0
        %v361 = vmax.f32 %v233, -20.0
        %v362 = vmax.f32 %v234, -20.0
        %v363 = vmax.f32 %v235, -20.0
        %v364 = vmax.f32 %v236, -20.0
        %v365 = vmax.f32 %v237, -20.0
        %v366 = vmax.f32 %v238, -20.0
        %v367 = vmax.f32 %v239, -20.0
        %v368 = vmax.f32 %v240, -20.0
        %v369 = vmax.f32 %v241, -20.0
        %v370 = vmax.f32 %v242, -20.0
        %v371 = vmax.f32 %v243, -20.0
        %v372 = vmax.f32 %v244, -20.0
        %v373 = vmax.f32 %v245, -20.0
        %v374 = vmax.f32 %v246, -20.0
        %v375 = vmax.f32 %v247, -20.0
        %v376 = vmax.f32 %v248, -20.0
        %v377 = vmax.f32 %v249, -20.0
        %v378 = vmax.f32 %v250, -20.0
        %v379 = vmax.f32 %v251, -20.0
        %v380 = vmax.f32 %v252, -20.0
        %v381 = vmax.f32 %v253, -20.0
        %v382 = vmax.f32 %v254, -20.0
        %v383 = vmax.f32 %v255, -20.0
        %v384 = vmax.f32 %v256, -20.0
        %v385 = vmax.f32 %v257, -20.0
        %v386 = vmax.f32 %v258, -20.0
        %v387 = vmax.f32 %v259, -20.0
        %v388 = vmax.f32 %v260, -20.0
        %v389 = vmax.f32 %v261, -20.0
        %v390 = vmax.f32 %v262, -20.0
        %v391 = vmax.f32 %v263, -20.0
        %v392 = vmax.f32 %v264, -20.0
        %v393 = vmax.f32 %v265, -20.0
        %v394 = vmax.f32 %v266, -20.0
        %v395 = vmax.f32 %v267, -20.0
        %v396 = vmax.f32 %v268, -20.0
        %v397 = vmax.f32 %v269, -20.0
        %v398 = vmax.f32 %v270, -20.0
        %v399 = vmax.f32 %v271, -20.0
        %v400 = vmax.f32 %v272, -20.0
        %v401 = vmax.f32 %v273, -20.0
        %v402 = vmax.f32 %v274, -20.0
        %v403 = vmax.f32 %v275, -20.0
        %v404 = vmax.f32 %v276, -20.0
        %v405 = vmax.f32 %v277, -20.0
        %v406 = vmax.f32 %v278, -20.0
        %v407 = vmax.f32 %v279, -20.0
        %v408 = vmax.f32 %v280, -20.0
        %v409 = vmax.f32 %v281, -20.0
        %v410 = vmax.f32 %v282, -20.0
        %v411 = vmax.f32 %v283, -20.0
        %v412 = vmax.f32 %v284, -20.0
        %v413 = vmax.f32 %v285, -20.0
        %v414 = vmin.f32 %v286, 11.0
        %v415 = vmin.f32 %v287, 11.0
        %v416 = vmin.f32 %v288, 11.0
        %v417 = vmin.f32 %v289, 11.0
        %v418 = vmin.f32 %v290, 11.0
        %v419 = vmin.f32 %v291, 11.0
        %v420 = vmin.f32 %v292, 11.0
        %v421 = vmin.f32 %v293, 11.0
        %v422 = vmin.f32 %v294, 11.0
        %v423 = vmin.f32 %v295, 11.0
        %v424 = vmin.f32 %v296, 11.0
        %v425 = vmin.f32 %v297, 11.0
        %v426 = vmin.f32 %v298, 11.0
        %v427 = vmin.f32 %v299, 11.0
        %v428 = vmin.f32 %v300, 11.0
        %v429 = vmin.f32 %v301, 11.0
        %v430 = vmin.f32 %v302, 11.0
        %v431 = vmin.f32 %v303, 11.0
        %v432 = vmin.f32 %v304, 11.0
        %v433 = vmin.f32 %v305, 11.0
        %v434 = vmin.f32 %v306, 11.0
        %v435 = vmin.f32 %v307, 11.0
        %v436 = vmin.f32 %v308, 11.0
        %v437 = vmin.f32 %v309, 11.0
        %v438 = vmin.f32 %v310, 11.0
        %v439 = vmin.f32 %v311, 11.0
        %v440 = vmin.f32 %v312, 11.0
        %v441 = vmin.f32 %v313, 11.0
        %v442 = vmin.f32 %v314, 11.0
        %v443 = vmin.f32 %v315, 11.0
        %v444 = vmin.f32 %v316, 11.0
        %v445 = vmin.f32 %v317, 11.0
        %v446 = vmin.f32 %v318, 11.0
        %v447 = vmin.f32 %v319, 11.0
        %v448 = vmin.f32 %v320, 11.0
        %v449 = vmin.f32 %v321, 11.0
        %v450 = vmin.f32 %v322, 11.0
        %v451 = vmin.f32 %v323, 11.0
        %v452 = vmin.f32 %v324, 11.0
        %v453 = vmin.f32 %v325, 11.0
        %v454 = vmin.f32 %v326, 11.0
        %v455 = vmin.f32 %v327, 11.0
        %v456 = vmin.f32 %v328, 11.0
        %v457 = vmin.f32 %v329, 11.0
        %v458 = vmin.f32 %v330, 11.0
        %v459 = vmin.f32 %v331, 11.0
        %v460 = vmin.f32 %v332, 11.0
        %v461 = vmin.f32 %v333, 11.0
        %v462 = vmin.f32 %v334, 11.0
        %v463 = vmin.f32 %v335, 11.0
        %v464 = vmin.f32 %v336, 11.0
        %v465 = vmin.f32 %v337, 11.0
        %v466 = vmin.f32 %v338, 11.0
        %v467 = vmin.f32 %v339, 11.0
        %v468 = vmin.f32 %v340, 11.0
        %v469 = vmin.f32 %v341, 11.0
        %v470 = vmin.f32 %v342, 11.0
        %v471 = vmin.f32 %v343, 11.0
        %v472 = vmin.f32 %v344, 11.0
        %v473 = vmin.f32 %v345, 11.0
        %v474 = vmin.f32 %v346, 11.0
        %v475 = vmin.f32 %v347, 11.0
        %v476 = vmin.f32 %v348, 11.0
        %v477 = vmin.f32 %v349, 11.0
        %v478 = vmin.f32 %v350, 11.0
        %v479 = vmin.f32 %v351, 11.0
        %v480 = vmin.f32 %v352, 11.0
        %v481 = vmin.f32 %v353, 11.0
        %v482 = vmin.f32 %v354, 11.0
        %v483 = vmin.f32 %v355, 11.0
        %v484 = vmin.f32 %v356, 11.0
        %v485 = vmin.f32 %v357, 11.0
        %v486 = vmin.f32 %v358, 11.0
        %v487 = vmin.f32 %v359, 11.0
        %v488 = vmin.f32 %v360, 11.0
        %v489 = vmin.f32 %v361, 11.0
        %v490 = vmin.f32 %v362, 11.0
        %v491 = vmin.f32 %v363, 11.0
        %v492 = vmin.f32 %v364, 11.0
        %v493 = vmin.f32 %v365, 11.0
        %v494 = vmin.f32 %v366, 11.0
        %v495 = vmin.f32 %v367, 11.0
        %v496 = vmin.f32 %v368, 11.0
        %v497 = vmin.f32 %v369, 11.0
        %v498 = vmin.f32 %v370, 11.0
        %v499 = vmin.f32 %v371, 11.0
        %v500 = vmin.f32 %v372, 11.0
        %v501 = vmin.f32 %v373, 11.0
        %v502 = vmin.f32 %v374, 11.0
        %v503 = vmin.f32 %v375, 11.0
        %v504 = vmin.f32 %v376, 11.0
        %v505 = vmin.f32 %v377, 11.0
        %v506 = vmin.f32 %v378, 11.0
        %v507 = vmin.f32 %v379, 11.0
        %v508 = vmin.f32 %v380, 11.0
        %v509 = vmin.f32 %v381, 11.0
        %v510 = vmin.f32 %v382, 11.0
        %v511 = vmin.f32 %v383, 11.0
        %v512 = vmin.f32 %v384, 11.0
        %v513 = vmin.f32 %v385, 11.0
        %v514 = vmin.f32 %v386, 11.0
        %v515 = vmin.f32 %v387, 11.0
        %v516 = vmin.f32 %v388, 11.0
        %v517 = vmin.f32 %v389, 11.0
        %v518 = vmin.f32 %v390, 11.0
        %v519 = vmin.f32 %v391, 11.0
        %v520 = vmin.f32 %v392, 11.0
        %v521 = vmin.f32 %v393, 11.0
        %v522 = vmin.f32 %v394, 11.0
        %v523 = vmin.f32 %v395, 11.0
        %v524 = vmin.f32 %v396, 11.0
        %v525 = vmin.f32 %v397, 11.0
        %v526 = vmin.f32 %v398, 11.0
        %v527 = vmin.f32 %v399, 11.0
        %v528 = vmin.f32 %v400, 11.0
        %v529 = vmin.f32 %v401, 11.0
        %v530 = vmin.f32 %v402, 11.0
        %v531 = vmin.f32 %v403, 11.0
        %v532 = vmin.f32 %v404, 11.0
        %v533 = vmin.f32 %v405, 11.0
        %v534 = vmin.f32 %v406, 11.0
        %v535 = vmin.f32 %v407, 11.0
        %v536 = vmin.f32 %v408, 11.0
        %v537 = vmin.f32 %v409, 11.0
        %v538 = vmin.f32 %v410, 11.0
        %v539 = vmin.f32 %v411, 11.0
        %v540 = vmin.f32 %v412, 11.0
        %v541 = vmin.f32 %v413, 11.0
        %v542 = vmul.f32 %v414, 1.442695
        %v543 = vpow.pop %v542
        %v544 = vmul.f32 %v415, 1.442695
        %v545 = vpow.pop %v544
        %v546 = vmul.f32 %v416, 1.442695
        %v547 = vpow.pop %v546
        %v548 = vmul.f32 %v417, 1.442695
        %v549 = vpow.pop %v548
        %v550 = vmul.f32 %v418, 1.442695
        %v551 = vpow.pop %v550
        %v552 = vmul.f32 %v419, 1.442695
        %v553 = vpow.pop %v552
        %v554 = vmul.f32 %v420, 1.442695
        %v555 = vpow.pop %v554
        %v556 = vmul.f32 %v421, 1.442695
        %v557 = vpow.pop %v556
        %v558 = vmul.f32 %v422, 1.442695
        %v559 = vpow.pop %v558
        %v560 = vmul.f32 %v423, 1.442695
        %v561 = vpow.pop %v560
        %v562 = vmul.f32 %v424, 1.442695
        %v563 = vpow.pop %v562
        %v564 = vmul.f32 %v425, 1.442695
        %v565 = vpow.pop %v564
        %v566 = vmul.f32 %v426, 1.442695
        %v567 = vpow.pop %v566
        %v568 = vmul.f32 %v427, 1.442695
        %v569 = vpow.pop %v568
        %v570 = vmul.f32 %v428, 1.442695
        %v571 = vpow.pop %v570
        %v572 = vmul.f32 %v429, 1.442695
        %v573 = vpow.pop %v572
        %v574 = vmul.f32 %v430, 1.442695
        %v575 = vpow.pop %v574
        %v576 = vmul.f32 %v431, 1.442695
        %v577 = vpow.pop %v576
        %v578 = vmul.f32 %v432, 1.442695
        %v579 = vpow.pop %v578
        %v580 = vmul.f32 %v433, 1.442695
        %v581 = vpow.pop %v580
        %v582 = vmul.f32 %v434, 1.442695
        %v583 = vpow.pop %v582
        %v584 = vmul.f32 %v435, 1.442695
        %v585 = vpow.pop %v584
        %v586 = vmul.f32 %v436, 1.442695
        %v587 = vpow.pop %v586
        %v588 = vmul.f32 %v437, 1.442695
        %v589 = vpow.pop %v588
        %v590 = vmul.f32 %v438, 1.442695
        %v591 = vpow.pop %v590
        %v592 = vmul.f32 %v439, 1.442695
        %v593 = vpow.pop %v592
        %v594 = vmul.f32 %v440, 1.442695
        %v595 = vpow.pop %v594
        %v596 = vmul.f32 %v441, 1.442695
        %v597 = vpow.pop %v596
        %v598 = vmul.f32 %v442, 1.442695
        %v599 = vpow.pop %v598
        %v600 = vmul.f32 %v443, 1.442695
        %v601 = vpow.pop %v600
        %v602 = vmul.f32 %v444, 1.442695
        %v603 = vpow.pop %v602
        %v604 = vmul.f32 %v445, 1.442695
        %v605 = vpow.pop %v604
        %v606 = vmul.f32 %v446, 1.442695
        %v607 = vpow.pop %v606
        %v608 = vmul.f32 %v447, 1.442695
        %v609 = vpow.pop %v608
        %v610 = vmul.f32 %v448, 1.442695
        %v611 = vpow.pop %v610
        %v612 = vmul.f32 %v449, 1.442695
        %v613 = vpow.pop %v612
        %v614 = vmul.f32 %v450, 1.442695
        %v615 = vpow.pop %v614
        %v616 = vmul.f32 %v451, 1.442695
        %v617 = vpow.pop %v616
        %v618 = vmul.f32 %v452, 1.442695
        %v619 = vpow.pop %v618
        %v620 = vmul.f32 %v453, 1.442695
        %v621 = vpow.pop %v620
        %v622 = vmul.f32 %v454, 1.442695
        %v623 = vpow.pop %v622
        %v624 = vmul.f32 %v455, 1.442695
        %v625 = vpow.pop %v624
        %v626 = vmul.f32 %v456, 1.442695
        %v627 = vpow.pop %v626
        %v628 = vmul.f32 %v457, 1.442695
        %v629 = vpow.pop %v628
        %v630 = vmul.f32 %v458, 1.442695
        %v631 = vpow.pop %v630
        %v632 = vmul.f32 %v459, 1.442695
        %v633 = vpow.pop %v632
        %v634 = vmul.f32 %v460, 1.442695
        %v635 = vpow.pop %v634
        %v636 = vmul.f32 %v461, 1.442695
        %v637 = vpow.pop %v636
        %v638 = vmul.f32 %v462, 1.442695
        %v639 = vpow.pop %v638
        %v640 = vmul.f32 %v463, 1.442695
        %v641 = vpow.pop %v640
        %v642 = vmul.f32 %v464, 1.442695
        %v643 = vpow.pop %v642
        %v644 = vmul.f32 %v465, 1.442695
        %v645 = vpow.pop %v644
        %v646 = vmul.f32 %v466, 1.442695
        %v647 = vpow.pop %v646
        %v648 = vmul.f32 %v467, 1.442695
        %v649 = vpow.pop %v648
        %v650 = vmul.f32 %v468, 1.442695
        %v651 = vpow.pop %v650
        %v652 = vmul.f32 %v469, 1.442695
        %v653 = vpow.pop %v652
        %v654 = vmul.f32 %v470, 1.442695
        %v655 = vpow.pop %v654
        %v656 = vmul.f32 %v471, 1.442695
        %v657 = vpow.pop %v656
        %v658 = vmul.f32 %v472, 1.442695
        %v659 = vpow.pop %v658
        %v660 = vmul.f32 %v473, 1.442695
        %v661 = vpow.pop %v660
        %v662 = vmul.f32 %v474, 1.442695
        %v663 = vpow.pop %v662
        %v664 = vmul.f32 %v475, 1.442695
        %v665 = vpow.pop %v664
        %v666 = vmul.f32 %v476, 1.442695
        %v667 = vpow.pop %v666
        %v668 = vmul.f32 %v477, 1.442695
        %v669 = vpow.pop %v668
        %v670 = vmul.f32 %v478, 1.442695
        %v671 = vpow.pop %v670
        %v672 = vmul.f32 %v479, 1.442695
        %v673 = vpow.pop %v672
        %v674 = vmul.f32 %v480, 1.442695
        %v675 = vpow.pop %v674
        %v676 = vmul.f32 %v481, 1.442695
        %v677 = vpow.pop %v676
        %v678 = vmul.f32 %v482, 1.442695
        %v679 = vpow.pop %v678
        %v680 = vmul.f32 %v483, 1.442695
        %v681 = vpow.pop %v680
        %v682 = vmul.f32 %v484, 1.442695
        %v683 = vpow.pop %v682
        %v684 = vmul.f32 %v485, 1.442695
        %v685 = vpow.pop %v684
        %v686 = vmul.f32 %v486, 1.442695
        %v687 = vpow.pop %v686
        %v688 = vmul.f32 %v487, 1.442695
        %v689 = vpow.pop %v688
        %v690 = vmul.f32 %v488, 1.442695
        %v691 = vpow.pop %v690
        %v692 = vmul.f32 %v489, 1.442695
        %v693 = vpow.pop %v692
        %v694 = vmul.f32 %v490, 1.442695
        %v695 = vpow.pop %v694
        %v696 = vmul.f32 %v491, 1.442695
        %v697 = vpow.pop %v696
        %v698 = vmul.f32 %v492, 1.442695
        %v699 = vpow.pop %v698
        %v700 = vmul.f32 %v493, 1.442695
        %v701 = vpow.pop %v700
        %v702 = vmul.f32 %v494, 1.442695
        %v703 = vpow.pop %v702
        %v704 = vmul.f32 %v495, 1.442695
        %v705 = vpow.pop %v704
        %v706 = vmul.f32 %v496, 1.442695
        %v707 = vpow.pop %v706
        %v708 = vmul.f32 %v497, 1.442695
        %v709 = vpow.pop %v708
        %v710 = vmul.f32 %v498, 1.442695
        %v711 = vpow.pop %v710
        %v712 = vmul.f32 %v499, 1.442695
        %v713 = vpow.pop %v712
        %v714 = vmul.f32 %v500, 1.442695
        %v715 = vpow.pop %v714
        %v716 = vmul.f32 %v501, 1.442695
        %v717 = vpow.pop %v716
        %v718 = vmul.f32 %v502, 1.442695
        %v719 = vpow.pop %v718
        %v720 = vmul.f32 %v503, 1.442695
        %v721 = vpow.pop %v720
        %v722 = vmul.f32 %v504, 1.442695
        %v723 = vpow.pop %v722
        %v724 = vmul.f32 %v505, 1.442695
        %v725 = vpow.pop %v724
        %v726 = vmul.f32 %v506, 1.442695
        %v727 = vpow.pop %v726
        %v728 = vmul.f32 %v507, 1.442695
        %v729 = vpow.pop %v728
        %v730 = vmul.f32 %v508, 1.442695
        %v731 = vpow.pop %v730
        %v732 = vmul.f32 %v509, 1.442695
        %v733 = vpow.pop %v732
        %v734 = vmul.f32 %v510, 1.442695
        %v735 = vpow.pop %v734
        %v736 = vmul.f32 %v511, 1.442695
        %v737 = vpow.pop %v736
        %v738 = vmul.f32 %v512, 1.442695
        %v739 = vpow.pop %v738
        %v740 = vmul.f32 %v513, 1.442695
        %v741 = vpow.pop %v740
        %v742 = vmul.f32 %v514, 1.442695
        %v743 = vpow.pop %v742
        %v744 = vmul.f32 %v515, 1.442695
        %v745 = vpow.pop %v744
        %v746 = vmul.f32 %v516, 1.442695
        %v747 = vpow.pop %v746
        %v748 = vmul.f32 %v517, 1.442695
        %v749 = vpow.pop %v748
        %v750 = vmul.f32 %v518, 1.442695
        %v751 = vpow.pop %v750
        %v752 = vmul.f32 %v519, 1.442695
        %v753 = vpow.pop %v752
        %v754 = vmul.f32 %v520, 1.442695
        %v755 = vpow.pop %v754
        %v756 = vmul.f32 %v521, 1.442695
        %v757 = vpow.pop %v756
        %v758 = vmul.f32 %v522, 1.442695
        %v759 = vpow.pop %v758
        %v760 = vmul.f32 %v523, 1.442695
        %v761 = vpow.pop %v760
        %v762 = vmul.f32 %v524, 1.442695
        %v763 = vpow.pop %v762
        %v764 = vmul.f32 %v525, 1.442695
        %v765 = vpow.pop %v764
        %v766 = vmul.f32 %v526, 1.442695
        %v767 = vpow.pop %v766
        %v768 = vmul.f32 %v527, 1.442695
        %v769 = vpow.pop %v768
        %v770 = vmul.f32 %v528, 1.442695
        %v771 = vpow.pop %v770
        %v772 = vmul.f32 %v529, 1.442695
        %v773 = vpow.pop %v772
        %v774 = vmul.f32 %v530, 1.442695
        %v775 = vpow.pop %v774
        %v776 = vmul.f32 %v531, 1.442695
        %v777 = vpow.pop %v776
        %v778 = vmul.f32 %v532, 1.442695
        %v779 = vpow.pop %v778
        %v780 = vmul.f32 %v533, 1.442695
        %v781 = vpow.pop %v780
        %v782 = vmul.f32 %v534, 1.442695
        %v783 = vpow.pop %v782
        %v784 = vmul.f32 %v535, 1.442695
        %v785 = vpow.pop %v784
        %v786 = vmul.f32 %v536, 1.442695
        %v787 = vpow.pop %v786
        %v788 = vmul.f32 %v537, 1.442695
        %v789 = vpow.pop %v788
        %v790 = vmul.f32 %v538, 1.442695
        %v791 = vpow.pop %v790
        %v792 = vmul.f32 %v539, 1.442695
        %v793 = vpow.pop %v792
        %v794 = vmul.f32 %v540, 1.442695
        %v795 = vpow.pop %v794
        %v796 = vmul.f32 %v541, 1.442695
        %v797 = vpow.pop %v796
        %798 = vst [vmem:[%s153] sm:$0xff] %v543
        %799 = vst [vmem:[%s153 + $0x8] sm:$0xff] %v545
        %800 = vst [vmem:[%s153 + $0x10] sm:$0xff] %v547
        %801 = vst [vmem:[%s153 + $0x18] sm:$0xff] %v549
        %802 = vst [vmem:[%s153 + $0x20] sm:$0xff] %v551
        %803 = vst [vmem:[%s153 + $0x28] sm:$0xff] %v553
        %804 = vst [vmem:[%s153 + $0x30] sm:$0xff] %v555
        %805 = vst [vmem:[%s153 + $0x38] sm:$0xff] %v557
        %806 = vst [vmem:[%s153 + $0x40] sm:$0xff] %v559
        %807 = vst [vmem:[%s153 + $0x48] sm:$0xff] %v561
        %808 = vst [vmem:[%s153 + $0x50] sm:$0xff] %v563
        %809 = vst [vmem:[%s153 + $0x58] sm:$0xff] %v565
        %810 = vst [vmem:[%s153 + $0x60] sm:$0xff] %v567
        %811 = vst [vmem:[%s153 + $0x68] sm:$0xff] %v569
        %812 = vst [vmem:[%s153 + $0x70] sm:$0xff] %v571
        %813 = vst [vmem:[%s153 + $0x78] sm:$0xff] %v573
        %814 = vst [vmem:[%s153 + $0x80] sm:$0xff] %v575
        %815 = vst [vmem:[%s153 + $0x88] sm:$0xff] %v577
        %816 = vst [vmem:[%s153 + $0x90] sm:$0xff] %v579
        %817 = vst [vmem:[%s153 + $0x98] sm:$0xff] %v581
        %818 = vst [vmem:[%s153 + $0xa0] sm:$0xff] %v583
        %819 = vst [vmem:[%s153 + $0xa8] sm:$0xff] %v585
        %820 = vst [vmem:[%s153 + $0xb0] sm:$0xff] %v587
        %821 = vst [vmem:[%s153 + $0xb8] sm:$0xff] %v589
        %822 = vst [vmem:[%s153 + $0xc0] sm:$0xff] %v591
        %823 = vst [vmem:[%s153 + $0xc8] sm:$0xff] %v593
        %824 = vst [vmem:[%s153 + $0xd0] sm:$0xff] %v595
        %825 = vst [vmem:[%s153 + $0xd8] sm:$0xff] %v597
        %826 = vst [vmem:[%s153 + $0xe0] sm:$0xff] %v599
        %827 = vst [vmem:[%s153 + $0xe8] sm:$0xff] %v601
        %828 = vst [vmem:[%s153 + $0xf0] sm:$0xff] %v603
        %829 = vst [vmem:[%s153 + $0xf8] sm:$0xff] %v605
        %830 = vst [vmem:[%s153 + $0x100] sm:$0xff] %v607
        %831 = vst [vmem:[%s153 + $0x108] sm:$0xff] %v609
        %832 = vst [vmem:[%s153 + $0x110] sm:$0xff] %v611
        %833 = vst [vmem:[%s153 + $0x118] sm:$0xff] %v613
        %834 = vst [vmem:[%s153 + $0x120] sm:$0xff] %v615
        %835 = vst [vmem:[%s153 + $0x128] sm:$0xff] %v617
        %836 = vst [vmem:[%s153 + $0x130] sm:$0xff] %v619
        %837 = vst [vmem:[%s153 + $0x138] sm:$0xff] %v621
        %838 = vst [vmem:[%s153 + $0x140] sm:$0xff] %v623
        %839 = vst [vmem:[%s153 + $0x148] sm:$0xff] %v625
        %840 = vst [vmem:[%s153 + $0x150] sm:$0xff] %v627
        %841 = vst [vmem:[%s153 + $0x158] sm:$0xff] %v629
        %842 = vst [vmem:[%s153 + $0x160] sm:$0xff] %v631
        %843 = vst [vmem:[%s153 + $0x168] sm:$0xff] %v633
        %844 = vst [vmem:[%s153 + $0x170] sm:$0xff] %v635
        %845 = vst [vmem:[%s153 + $0x178] sm:$0xff] %v637
        %846 = vst [vmem:[%s153 + $0x180] sm:$0xff] %v639
        %847 = vst [vmem:[%s153 + $0x188] sm:$0xff] %v641
        %848 = vst [vmem:[%s153 + $0x190] sm:$0xff] %v643
        %849 = vst [vmem:[%s153 + $0x198] sm:$0xff] %v645
        %850 = vst [vmem:[%s153 + $0x1a0] sm:$0xff] %v647
        %851 = vst [vmem:[%s153 + $0x1a8] sm:$0xff] %v649
        %852 = vst [vmem:[%s153 + $0x1b0] sm:$0xff] %v651
        %853 = vst [vmem:[%s153 + $0x1b8] sm:$0xff] %v653
        %854 = vst [vmem:[%s153 + $0x1c0] sm:$0xff] %v655
        %855 = vst [vmem:[%s153 + $0x1c8] sm:$0xff] %v657
        %856 = vst [vmem:[%s153 + $0x1d0] sm:$0xff] %v659
        %857 = vst [vmem:[%s153 + $0x1d8] sm:$0xff] %v661
        %858 = vst [vmem:[%s153 + $0x1e0] sm:$0xff] %v663
        %859 = vst [vmem:[%s153 + $0x1e8] sm:$0xff] %v665
        %860 = vst [vmem:[%s153 + $0x1f0] sm:$0xff] %v667
        %861 = vst [vmem:[%s153 + $0x1f8] sm:$0xff] %v669
        %862 = vst [vmem:[%s153 + $0x200] sm:$0xff] %v671
        %863 = vst [vmem:[%s153 + $0x208] sm:$0xff] %v673
        %864 = vst [vmem:[%s153 + $0x210] sm:$0xff] %v675
        %865 = vst [vmem:[%s153 + $0x218] sm:$0xff] %v677
        %866 = vst [vmem:[%s153 + $0x220] sm:$0xff] %v679
        %867 = vst [vmem:[%s153 + $0x228] sm:$0xff] %v681
        %868 = vst [vmem:[%s153 + $0x230] sm:$0xff] %v683
        %869 = vst [vmem:[%s153 + $0x238] sm:$0xff] %v685
        %870 = vst [vmem:[%s153 + $0x240] sm:$0xff] %v687
        %871 = vst [vmem:[%s153 + $0x248] sm:$0xff] %v689
        %872 = vst [vmem:[%s153 + $0x250] sm:$0xff] %v691
        %873 = vst [vmem:[%s153 + $0x258] sm:$0xff] %v693
        %874 = vst [vmem:[%s153 + $0x260] sm:$0xff] %v695
        %875 = vst [vmem:[%s153 + $0x268] sm:$0xff] %v697
        %876 = vst [vmem:[%s153 + $0x270] sm:$0xff] %v699
        %877 = vst [vmem:[%s153 + $0x278] sm:$0xff] %v701
        %878 = vst [vmem:[%s153 + $0x280] sm:$0xff] %v703
        %879 = vst [vmem:[%s153 + $0x288] sm:$0xff] %v705
        %880 = vst [vmem:[%s153 + $0x290] sm:$0xff] %v707
        %881 = vst [vmem:[%s153 + $0x298] sm:$0xff] %v709
        %882 = vst [vmem:[%s153 + $0x2a0] sm:$0xff] %v711
        %883 = vst [vmem:[%s153 + $0x2a8] sm:$0xff] %v713
        %884 = vst [vmem:[%s153 + $0x2b0] sm:$0xff] %v715
        %885 = vst [vmem:[%s153 + $0x2b8] sm:$0xff] %v717
        %886 = vst [vmem:[%s153 + $0x2c0] sm:$0xff] %v719
        %887 = vst [vmem:[%s153 + $0x2c8] sm:$0xff] %v721
        %888 = vst [vmem:[%s153 + $0x2d0] sm:$0xff] %v723
        %889 = vst [vmem:[%s153 + $0x2d8] sm:$0xff] %v725
        %890 = vst [vmem:[%s153 + $0x2e0] sm:$0xff] %v727
        %891 = vst [vmem:[%s153 + $0x2e8] sm:$0xff] %v729
        %892 = vst [vmem:[%s153 + $0x2f0] sm:$0xff] %v731
        %893 = vst [vmem:[%s153 + $0x2f8] sm:$0xff] %v733
        %894 = vst [vmem:[%s153 + $0x300] sm:$0xff] %v735
        %895 = vst [vmem:[%s153 + $0x308] sm:$0xff] %v737
        %896 = vst [vmem:[%s153 + $0x310] sm:$0xff] %v739
        %897 = vst [vmem:[%s153 + $0x318] sm:$0xff] %v741
        %898 = vst [vmem:[%s153 + $0x320] sm:$0xff] %v743
        %899 = vst [vmem:[%s153 + $0x328] sm:$0xff] %v745
        %900 = vst [vmem:[%s153 + $0x330] sm:$0xff] %v747
        %901 = vst [vmem:[%s153 + $0x338] sm:$0xff] %v749
        %902 = vst [vmem:[%s153 + $0x340] sm:$0xff] %v751
        %903 = vst [vmem:[%s153 + $0x348] sm:$0xff] %v753
        %904 = vst [vmem:[%s153 + $0x350] sm:$0xff] %v755
        %905 = vst [vmem:[%s153 + $0x358] sm:$0xff] %v757
        %906 = vst [vmem:[%s153 + $0x360] sm:$0xff] %v759
        %907 = vst [vmem:[%s153 + $0x368] sm:$0xff] %v761
        %908 = vst [vmem:[%s153 + $0x370] sm:$0xff] %v763
        %909 = vst [vmem:[%s153 + $0x378] sm:$0xff] %v765
        %910 = vst [vmem:[%s153 + $0x380] sm:$0xff] %v767
        %911 = vst [vmem:[%s153 + $0x388] sm:$0xff] %v769
        %912 = vst [vmem:[%s153 + $0x390] sm:$0xff] %v771
        %913 = vst [vmem:[%s153 + $0x398] sm:$0xff] %v773
        %914 = vst [vmem:[%s153 + $0x3a0] sm:$0xff] %v775
        %915 = vst [vmem:[%s153 + $0x3a8] sm:$0xff] %v777
        %916 = vst [vmem:[%s153 + $0x3b0] sm:$0xff] %v779
        %917 = vst [vmem:[%s153 + $0x3b8] sm:$0xff] %v781
        %918 = vst [vmem:[%s153 + $0x3c0] sm:$0xff] %v783
        %919 = vst [vmem:[%s153 + $0x3c8] sm:$0xff] %v785
        %920 = vst [vmem:[%s153 + $0x3d0] sm:$0xff] %v787
        %921 = vst [vmem:[%s153 + $0x3d8] sm:$0xff] %v789
        %922 = vst [vmem:[%s153 + $0x3e0] sm:$0xff] %v791
        %923 = vst [vmem:[%s153 + $0x3e8] sm:$0xff] %v793
        %924 = vst [vmem:[%s153 + $0x3f0] sm:$0xff] %v795
        %925 = vst [vmem:[%s153 + $0x3f8] sm:$0xff] %v797
        %s926 = sand.u32 %s68, 1
        %s927 = scalar_lea.sflag [#allocation4], %s926
        %s928 = sand.u32 %s68, 1
        %s929 = smul.addr %s928, 1024
        %s930 = scalar_lea.vmem [#allocation5], %s929
        // Predicated region
        $region29: #{tpu_custom_call.1} parent=23 // pred_check
          %p931 = pneg %p78
        $region30: #{tpu_custom_call.1} parent=23 // pred_check_branch
          %933 = sbr.rel (%p931) target = $region32
        $region31: #{tpu_custom_call.1} parent=23 // pred_region
          %s934 = smul.u32 32, %s22
          %s935 = smul.u32 4, %s23
          %s937 = ssub.s32 16384, 16384
          %938 = vsyncadd %s927, %s937
          %s939 = smul.addr %s934, 8
          %s940 = sadd.s32 %s935, %s939
          %s941 = smul.addr %s940, 128
          %s942 = scalar_lea.hbm %s1, %s941
          %s943 = sshll.u32 %s930, 4
          %s944 = int_to_ptr.vmem [resolvable:$true] %s943
          %949 = dma.vmem_to_hbm [thread:$0]  %s944, 16384, %s942, %s927, 512, 1024, 32
        $region32: #{tpu_custom_call.1} parent=23 // pred_fallthru
          _
      $region24: #{tpu_custom_call.1} parent=5 // pred_fallthru
        _
      %p950 = scmp.le.s32.totalorder 2, %s13
      // Predicated region
      $region33: #{tpu_custom_call.1} parent=5 // pred_check
        %p951 = pneg %p950
      $region34: #{tpu_custom_call.1} parent=5 // pred_check_branch
        %953 = sbr.rel (%p951) target = $region36
      $region35: #{tpu_custom_call.1} parent=5 // pred_region
        %s954 = ssub.s32 %s13, 2
        // Predicated region
        $region37: #{tpu_custom_call.1} parent=35 // pred_check
          %p955 = pneg %p84
        $region38: #{tpu_custom_call.1} parent=35 // pred_check_branch
          %957 = sbr.rel (%p955) target = $region40
        $region39: #{tpu_custom_call.1} parent=35 // pred_region
          %s958 = sand.u32 %s69, 1
          %s959 = scalar_lea.sflag [#allocation4], %s958
          %s960 = sand.u32 %s69, 1
          %s961 = smul.addr %s960, 1024
          %s962 = scalar_lea.vmem [#allocation5], %s961
          %963 = dma.done %s959, 16384
        $region40: #{tpu_custom_call.1} parent=35 // pred_fallthru
          _
      $region36: #{tpu_custom_call.1} parent=5 // pred_fallthru
        _
    $region6: #{tpu_custom_call.1} parent=1 // loop_footer
      %s17 = sadd.s32 1, %s13
    $region7: #{tpu_custom_call.1} parent=1 // loop_footer_branch
      %12 = sbr.rel target = $region3
    $region8: #{tpu_custom_call.1} parent=1 // loop_exit
      _
    %964 = vsyncpa [#allocation3], 1
    %s965 = scalar_lea.sflag [#allocation3], 1
    %966 = vsyncpa %s965, 1
    %967 = vsyncpa [#allocation4], 1
    %s968 = scalar_lea.sflag [#allocation4], 1
    %969 = vsyncpa %s968, 1

</llo_original>
